<compile_context>
chip_gen: v6e
topology: v6e:2x2x1
jax: 0.10.0
libtpu: 0.0.40
codegen_flags: <defaults>
</compile_context>

<pallas_src>
import functools

import jax
import jax.numpy as jnp
from jax.experimental import pallas as pl
from jax.experimental.pallas import tpu as pltpu


def _causal_shift(prod, d):
    """Shift a (L, C) matmul product down by d rows, zero-filling the first d.

    prod[t] = a[t] @ W  ->  returns r with r[t] = a[t-d] @ W  (0 for t < d).
    XLU sublane rotate + VPU select; no VMEM scratch round-trip.
    """
    shifted = pltpu.roll(prod, shift=d, axis=0)
    row = jax.lax.broadcasted_iota(jnp.int32, prod.shape, 0)
    return jnp.where(row >= d, shifted, 0.0)


def _tcn_fused_kernel(plan, L, *refs):
    """Fused TemporalConvNet forward for one batch element.

    plan: tuple of (dilation, has_downsample) per TemporalBlock (static).
    refs layout: x_ref, <per-layer weight refs>, o_ref
      per-layer weights: w1 (2,Cin,Cout) bf16, b1 (1,Cout) f32,
                         w2 (2,Cout,Cout) bf16, b2 (1,Cout) f32
                         [, wd (Cin,Cout) bf16, bd (1,Cout) f32]
    """
    n_w = sum(6 if has_down else 4 for _, has_down in plan)
    x_ref = refs[0]
    w_refs = refs[1:1 + n_w]
    o_ref = refs[1 + n_w]

    a = x_ref[0]                       # (L, C_in) f32 activation; stays on-chip
    wi = 0
    for d, has_down in plan:
        w1, b1, w2, b2 = w_refs[wi:wi + 4]
        wi += 4
        if has_down:
            wd, bd = w_refs[wi:wi + 2]
            wi += 2

        a16 = a.astype(jnp.bfloat16)   # bf16 MXU operands, f32 accumulation

        # --- conv1 (K=2, dilation d): taps at t-d and t, then ReLU ---
        h = jnp.dot(a16, w1[1], preferred_element_type=jnp.float32)
        if d < L:                      # t-d tap is identically zero when d >= L
            h0 = jnp.dot(a16, w1[0], preferred_element_type=jnp.float32)
            h = h + _causal_shift(h0, d)
        h = jnp.maximum(h + b1[...], 0.0)
        # TODO(synk): nn.Dropout(p=0.2) in training mode not implemented; identity at inference.

        # --- conv2 (K=2, dilation d) + ReLU ---
        h16 = h.astype(jnp.bfloat16)
        out = jnp.dot(h16, w2[1], preferred_element_type=jnp.float32)
        if d < L:
            o0 = jnp.dot(h16, w2[0], preferred_element_type=jnp.float32)
            out = out + _causal_shift(o0, d)
        out = jnp.maximum(out + b2[...], 0.0)

        # --- residual (1x1 conv on channel mismatch) + final ReLU ---
        if has_down:
            res = jnp.dot(a16, wd[...], preferred_element_type=jnp.float32) + bd[...]
        else:
            res = a
        a = jnp.maximum(out + res, 0.0)

    o_ref[0] = a


def temporal_conv_net(x_ncl, params):
    """x_ncl: (B, C_in, L) float32 (PyTorch NCL).  Returns (B, C_last, L).

    Inference-mode forward (dropout = identity).  weight_norm is assumed to be
    folded into the effective weights by the caller.
    """
    x = jnp.transpose(x_ncl, (0, 2, 1))      # -> (B, L, C), once for whole net
    B, L, C_in = x.shape

    plan = []
    args = [x]
    in_specs = [pl.BlockSpec((1, L, C_in), lambda b: (b, 0, 0))]
    flops = 0
    bytes_accessed = x.size * 4
    c_prev = C_in
    for i, p in enumerate(params):
        d = 2 ** i
        c_out = p["w1"].shape[-1]
        has_down = p["wd"] is not None
        plan.append((d, has_down))

        w1 = p["w1"].astype(jnp.bfloat16)    # bf16 weights: halve HBM/VMEM
        w2 = p["w2"].astype(jnp.bfloat16)
        in_specs += [
            pl.BlockSpec((2, c_prev, c_out), lambda b: (0, 0, 0)),
            pl.BlockSpec((1, c_out), lambda b: (0, 0)),
            pl.BlockSpec((2, c_out, c_out), lambda b: (0, 0, 0)),
            pl.BlockSpec((1, c_out), lambda b: (0, 0)),
        ]
        args += [w1, p["b1"], w2, p["b2"]]
        taps = 2 if d < L else 1
        flops += B * L * 2 * taps * (c_prev * c_out + c_out * c_out)
        bytes_accessed += 2 * (w1.size + w2.size) + 4 * (p["b1"].size + p["b2"].size)
        if has_down:
            wd = p["wd"].astype(jnp.bfloat16)
            in_specs += [
                pl.BlockSpec((c_prev, c_out), lambda b: (0, 0)),
                pl.BlockSpec((1, c_out), lambda b: (0, 0)),
            ]
            args += [wd, p["bd"]]
            flops += B * L * 2 * c_prev * c_out
            bytes_accessed += 2 * wd.size + 4 * p["bd"].size
        c_prev = c_out
    bytes_accessed += B * L * c_prev * 4

    kernel = functools.partial(_tcn_fused_kernel, tuple(plan), L)

    # Scoped-VMEM budget from the actual buffers: double-buffered I/O tiles,
    # (double-buffered) weights, plus headroom for the in-register (L, C)
    # temporaries. Clamped to sane bounds.
    weight_bytes = sum(int(a.size) * a.dtype.itemsize for a in args[1:])
    io_tile_bytes = 4 * L * (C_in + c_prev)
    max_c = max([C_in] + [p["w1"].shape[-1] for p in params])
    temp_bytes = 8 * L * max_c * 4
    vmem_limit = 2 * io_tile_bytes + 2 * weight_bytes + temp_bytes + (4 << 20)
    vmem_limit = int(min(max(vmem_limit, 16 << 20), 128 << 20))

    out = pl.pallas_call(
        kernel,
        out_shape=jax.ShapeDtypeStruct((B, L, c_prev), jnp.float32),
        grid_spec=pltpu.PrefetchScalarGridSpec(
            num_scalar_prefetch=0,
            grid=(B,),
            in_specs=in_specs,
            # NOTE: lane-dense output (C_last multiple of 128) avoids masked
            # vst on the final store; the toy config (C_last=16) cannot.
            out_specs=pl.BlockSpec((1, L, c_prev), lambda b: (b, 0, 0)),
        ),
        compiler_params=pltpu.CompilerParams(
            dimension_semantics=("parallel",),
            vmem_limit_bytes=vmem_limit),
        cost_estimate=pl.CostEstimate(
            flops=int(flops), transcendentals=0,
            bytes_accessed=int(bytes_accessed)),
    )(*args)

    return jnp.transpose(out, (0, 2, 1))     # -> (B, C_last, L)


def init_tcn_params(key, num_inputs, num_channels, kernel_size=2):
    """Deterministic parameter init matching the module's shapes.
    Weights are stored as (K, C_in, C_out) = transpose of torch (C_out, C_in, K)."""
    params = []
    for i, out_ch in enumerate(num_channels):
        in_ch = num_inputs if i == 0 else num_channels[i - 1]
        key, k1, k2, k3, k4, k5, k6 = jax.random.split(key, 7)
        p = {
            "w1": 0.01 * jax.random.normal(k1, (kernel_size, in_ch, out_ch), jnp.float32),
            "b1": 0.01 * jax.random.normal(k2, (1, out_ch), jnp.float32),
            "w2": 0.01 * jax.random.normal(k3, (kernel_size, out_ch, out_ch), jnp.float32),
            "b2": 0.01 * jax.random.normal(k4, (1, out_ch), jnp.float32),
        }
        if in_ch != out_ch:
            p["wd"] = 0.01 * jax.random.normal(k5, (in_ch, out_ch), jnp.float32)
            p["bd"] = 0.01 * jax.random.normal(k6, (1, out_ch), jnp.float32)
        else:
            p["wd"] = None
            p["bd"] = None
        params.append(p)
    return params


# ---------------- pure-JAX reference (for correctness check) ----------------
def _block_ref(x, w1, b1, w2, b2, wd, bd, d):
    B, L, _ = x.shape

    def causal_conv(inp, w, b):
        prev = jnp.pad(inp, ((0, 0), (d, 0), (0, 0)))[:, :L, :]
        return (jnp.einsum("blc,co->blo", prev, w[0])
                + jnp.einsum("blc,co->blo", inp, w[1]) + b)

    h = jax.nn.relu(causal_conv(x, w1, b1))
    out = jax.nn.relu(causal_conv(h, w2, b2))
    res = x if wd is None else jnp.einsum("blc,co->blo", x, wd) + bd
    return jax.nn.relu(out + res)


def _tcn_ref(x_ncl, params):
    x = jnp.transpose(x_ncl, (0, 2, 1))
    for i, p in enumerate(params):
        x = _block_ref(x, p["w1"], p["b1"], p["w2"], p["b2"],
                       p["wd"], p["bd"], 2 ** i)
    return jnp.transpose(x, (0, 2, 1))


if __name__ == "__main__":
    B, C_IN, L = 2, 4, 16
    NUM_CHANNELS = (8, 16)   # two levels: dilations 1, 2

    key = jax.random.PRNGKey(0)
    key, xk = jax.random.split(key)
    x = jax.random.normal(xk, (B, C_IN, L), jnp.float32)   # PyTorch NCL input

    params = init_tcn_params(key, C_IN, NUM_CHANNELS, kernel_size=2)

    out = jax.block_until_ready(temporal_conv_net(x, params))

    ref = _tcn_ref(x, params)          # f32 reference (kernel uses bf16 MXU ops)
    assert out.shape == (B, NUM_CHANNELS[-1], L), out.shape
    assert jnp.allclose(out, ref, atol=2e-3, rtol=2e-2), "mismatch vs reference"

    print("KERNEL_OK")
</pallas_src>

<mosaic_0001>
module attributes {stable_mosaic.version = 11 : i64} {
  func.func @_tcn_fused_kernel(%arg0: i32, %arg1: memref<1x16x4xf32, #tpu.memory_space<vmem>>, %arg2: memref<2x4x8xbf16, #tpu.memory_space<vmem>>, %arg3: memref<1x8xf32, #tpu.memory_space<vmem>>, %arg4: memref<2x8x8xbf16, #tpu.memory_space<vmem>>, %arg5: memref<1x8xf32, #tpu.memory_space<vmem>>, %arg6: memref<4x8xbf16, #tpu.memory_space<vmem>>, %arg7: memref<1x8xf32, #tpu.memory_space<vmem>>, %arg8: memref<2x8x16xbf16, #tpu.memory_space<vmem>>, %arg9: memref<1x16xf32, #tpu.memory_space<vmem>>, %arg10: memref<2x16x16xbf16, #tpu.memory_space<vmem>>, %arg11: memref<1x16xf32, #tpu.memory_space<vmem>>, %arg12: memref<8x16xbf16, #tpu.memory_space<vmem>>, %arg13: memref<1x16xf32, #tpu.memory_space<vmem>>, %arg14: memref<1x16x16xf32, #tpu.memory_space<vmem>>) attributes {dimension_semantics = [#tpu.dimension_semantics<parallel>], iteration_bounds = array<i64: 2>, scalar_prefetch = 0 : i64, scratch_operands = 0 : i64, tpu.core_type = #tpu.core_type<tc>, window_params = [{transform_indices = @transform_0, window_bounds = array<i64: 1, 16, 4>}, {pipeline_mode = #tpu.pipeline_mode<synchronous>, transform_indices = @transform_1, window_bounds = array<i64: 2, 4, 8>}, {pipeline_mode = #tpu.pipeline_mode<synchronous>, transform_indices = @transform_2, window_bounds = array<i64: 1, 8>}, {pipeline_mode = #tpu.pipeline_mode<synchronous>, transform_indices = @transform_3, window_bounds = array<i64: 2, 8, 8>}, {pipeline_mode = #tpu.pipeline_mode<synchronous>, transform_indices = @transform_4, window_bounds = array<i64: 1, 8>}, {pipeline_mode = #tpu.pipeline_mode<synchronous>, transform_indices = @transform_5, window_bounds = array<i64: 4, 8>}, {pipeline_mode = #tpu.pipeline_mode<synchronous>, transform_indices = @transform_6, window_bounds = array<i64: 1, 8>}, {pipeline_mode = #tpu.pipeline_mode<synchronous>, transform_indices = @transform_7, window_bounds = array<i64: 2, 8, 16>}, {pipeline_mode = #tpu.pipeline_mode<synchronous>, transform_indices = @transform_8, window_bounds = array<i64: 1, 16>}, {pipeline_mode = #tpu.pipeline_mode<synchronous>, transform_indices = @transform_9, window_bounds = array<i64: 2, 16, 16>}, {pipeline_mode = #tpu.pipeline_mode<synchronous>, transform_indices = @transform_10, window_bounds = array<i64: 1, 16>}, {pipeline_mode = #tpu.pipeline_mode<synchronous>, transform_indices = @transform_11, window_bounds = array<i64: 8, 16>}, {pipeline_mode = #tpu.pipeline_mode<synchronous>, transform_indices = @transform_12, window_bounds = array<i64: 1, 16>}, {transform_indices = @transform_13, window_bounds = array<i64: 1, 16, 16>}]} {
    %c0 = arith.constant 0 : index
    %c0_0 = arith.constant 0 : index
    %c0_1 = arith.constant 0 : index
    %0 = vector.load %arg1[%c0, %c0_0, %c0_1] : memref<1x16x4xf32, #tpu.memory_space<vmem>>, vector<1x16x4xf32>
    %1 = vector.shape_cast %0 : vector<1x16x4xf32> to vector<16x4xf32>
    %2 = arith.truncf %1 : vector<16x4xf32> to vector<16x4xbf16>
    %c1 = arith.constant 1 : index
    %c0_2 = arith.constant 0 : index
    %c0_3 = arith.constant 0 : index
    %3 = vector.load %arg2[%c1, %c0_2, %c0_3] : memref<2x4x8xbf16, #tpu.memory_space<vmem>>, vector<1x4x8xbf16>
    %4 = vector.shape_cast %3 : vector<1x4x8xbf16> to vector<4x8xbf16>
    %cst = arith.constant dense<0.000000e+00> : vector<16x8xf32>
    %5 = tpu.matmul %2, %4, %cst {dimension_numbers = #tpu.dot_dimension_numbers<[1], [0], [0], [1], [0, 0, 1, 1], [], []>} : vector<16x4xbf16>, vector<4x8xbf16>, vector<16x8xf32> -> vector<16x8xf32>
    %c0_4 = arith.constant 0 : index
    %c0_5 = arith.constant 0 : index
    %c0_6 = arith.constant 0 : index
    %6 = vector.load %arg2[%c0_4, %c0_5, %c0_6] : memref<2x4x8xbf16, #tpu.memory_space<vmem>>, vector<1x4x8xbf16>
    %7 = vector.shape_cast %6 : vector<1x4x8xbf16> to vector<4x8xbf16>
    %cst_7 = arith.constant dense<0.000000e+00> : vector<16x8xf32>
    %8 = tpu.matmul %2, %7, %cst_7 {dimension_numbers = #tpu.dot_dimension_numbers<[1], [0], [0], [1], [0, 0, 1, 1], [], []>} : vector<16x4xbf16>, vector<4x8xbf16>, vector<16x8xf32> -> vector<16x8xf32>
    %c1_i32 = arith.constant 1 : i32
    %9 = tpu.dynamic_rotate %8 by %c1_i32 dim 0 : vector<16x8xf32>, i32 -> vector<16x8xf32>
    %10 = tpu.iota {dimensions = array<i32: 0>} : vector<16x8xi32>
    %c1_i32_8 = arith.constant 1 : i32
    %11 = vector.broadcast %c1_i32_8 : i32 to vector<16x8xi32>
    %12 = arith.cmpi sge, %10, %11 : vector<16x8xi32>
    %cst_9 = arith.constant 0.000000e+00 : f32
    %13 = vector.broadcast %cst_9 : f32 to vector<16x8xf32>
    %14 = arith.select %12, %9, %13 : vector<16x8xi1>, vector<16x8xf32>
    %15 = arith.addf %5, %14 : vector<16x8xf32>
    %c0_10 = arith.constant 0 : index
    %c0_11 = arith.constant 0 : index
    %16 = vector.load %arg3[%c0_10, %c0_11] : memref<1x8xf32, #tpu.memory_space<vmem>>, vector<1x8xf32>
    %17 = vector.broadcast %16 : vector<1x8xf32> to vector<16x8xf32>
    %18 = arith.addf %15, %17 : vector<16x8xf32>
    %cst_12 = arith.constant 0.000000e+00 : f32
    %19 = vector.broadcast %cst_12 : f32 to vector<16x8xf32>
    %20 = arith.maximumf %18, %19 : vector<16x8xf32>
    %21 = arith.truncf %20 : vector<16x8xf32> to vector<16x8xbf16>
    %c1_13 = arith.constant 1 : index
    %c0_14 = arith.constant 0 : index
    %c0_15 = arith.constant 0 : index
    %22 = vector.load %arg4[%c1_13, %c0_14, %c0_15] : memref<2x8x8xbf16, #tpu.memory_space<vmem>>, vector<1x8x8xbf16>
    %23 = vector.shape_cast %22 : vector<1x8x8xbf16> to vector<8x8xbf16>
    %cst_16 = arith.constant dense<0.000000e+00> : vector<16x8xf32>
    %24 = tpu.matmul %21, %23, %cst_16 {dimension_numbers = #tpu.dot_dimension_numbers<[1], [0], [0], [1], [0, 0, 1, 1], [], []>} : vector<16x8xbf16>, vector<8x8xbf16>, vector<16x8xf32> -> vector<16x8xf32>
    %c0_17 = arith.constant 0 : index
    %c0_18 = arith.constant 0 : index
    %c0_19 = arith.constant 0 : index
    %25 = vector.load %arg4[%c0_17, %c0_18, %c0_19] : memref<2x8x8xbf16, #tpu.memory_space<vmem>>, vector<1x8x8xbf16>
    %26 = vector.shape_cast %25 : vector<1x8x8xbf16> to vector<8x8xbf16>
    %cst_20 = arith.constant dense<0.000000e+00> : vector<16x8xf32>
    %27 = tpu.matmul %21, %26, %cst_20 {dimension_numbers = #tpu.dot_dimension_numbers<[1], [0], [0], [1], [0, 0, 1, 1], [], []>} : vector<16x8xbf16>, vector<8x8xbf16>, vector<16x8xf32> -> vector<16x8xf32>
    %c1_i32_21 = arith.constant 1 : i32
    %28 = tpu.dynamic_rotate %27 by %c1_i32_21 dim 0 : vector<16x8xf32>, i32 -> vector<16x8xf32>
    %29 = tpu.iota {dimensions = array<i32: 0>} : vector<16x8xi32>
    %c1_i32_22 = arith.constant 1 : i32
    %30 = vector.broadcast %c1_i32_22 : i32 to vector<16x8xi32>
    %31 = arith.cmpi sge, %29, %30 : vector<16x8xi32>
    %cst_23 = arith.constant 0.000000e+00 : f32
    %32 = vector.broadcast %cst_23 : f32 to vector<16x8xf32>
    %33 = arith.select %31, %28, %32 : vector<16x8xi1>, vector<16x8xf32>
    %34 = arith.addf %24, %33 : vector<16x8xf32>
    %c0_24 = arith.constant 0 : index
    %c0_25 = arith.constant 0 : index
    %35 = vector.load %arg5[%c0_24, %c0_25] : memref<1x8xf32, #tpu.memory_space<vmem>>, vector<1x8xf32>
    %36 = vector.broadcast %35 : vector<1x8xf32> to vector<16x8xf32>
    %37 = arith.addf %34, %36 : vector<16x8xf32>
    %cst_26 = arith.constant 0.000000e+00 : f32
    %38 = vector.broadcast %cst_26 : f32 to vector<16x8xf32>
    %39 = arith.maximumf %37, %38 : vector<16x8xf32>
    %c0_27 = arith.constant 0 : index
    %c0_28 = arith.constant 0 : index
    %40 = vector.load %arg6[%c0_27, %c0_28] : memref<4x8xbf16, #tpu.memory_space<vmem>>, vector<4x8xbf16>
    %cst_29 = arith.constant dense<0.000000e+00> : vector<16x8xf32>
    %41 = tpu.matmul %2, %40, %cst_29 {dimension_numbers = #tpu.dot_dimension_numbers<[1], [0], [0], [1], [0, 0, 1, 1], [], []>} : vector<16x4xbf16>, vector<4x8xbf16>, vector<16x8xf32> -> vector<16x8xf32>
    %c0_30 = arith.constant 0 : index
    %c0_31 = arith.constant 0 : index
    %42 = vector.load %arg7[%c0_30, %c0_31] : memref<1x8xf32, #tpu.memory_space<vmem>>, vector<1x8xf32>
    %43 = vector.broadcast %42 : vector<1x8xf32> to vector<16x8xf32>
    %44 = arith.addf %41, %43 : vector<16x8xf32>
    %45 = arith.addf %39, %44 : vector<16x8xf32>
    %cst_32 = arith.constant 0.000000e+00 : f32
    %46 = vector.broadcast %cst_32 : f32 to vector<16x8xf32>
    %47 = arith.maximumf %45, %46 : vector<16x8xf32>
    %48 = arith.truncf %47 : vector<16x8xf32> to vector<16x8xbf16>
    %c1_33 = arith.constant 1 : index
    %c0_34 = arith.constant 0 : index
    %c0_35 = arith.constant 0 : index
    %49 = vector.load %arg8[%c1_33, %c0_34, %c0_35] : memref<2x8x16xbf16, #tpu.memory_space<vmem>>, vector<1x8x16xbf16>
    %50 = vector.shape_cast %49 : vector<1x8x16xbf16> to vector<8x16xbf16>
    %cst_36 = arith.constant dense<0.000000e+00> : vector<16x16xf32>
    %51 = tpu.matmul %48, %50, %cst_36 {dimension_numbers = #tpu.dot_dimension_numbers<[1], [0], [0], [1], [0, 0, 1, 1], [], []>} : vector<16x8xbf16>, vector<8x16xbf16>, vector<16x16xf32> -> vector<16x16xf32>
    %c0_37 = arith.constant 0 : index
    %c0_38 = arith.constant 0 : index
    %c0_39 = arith.constant 0 : index
    %52 = vector.load %arg8[%c0_37, %c0_38, %c0_39] : memref<2x8x16xbf16, #tpu.memory_space<vmem>>, vector<1x8x16xbf16>
    %53 = vector.shape_cast %52 : vector<1x8x16xbf16> to vector<8x16xbf16>
    %cst_40 = arith.constant dense<0.000000e+00> : vector<16x16xf32>
    %54 = tpu.matmul %48, %53, %cst_40 {dimension_numbers = #tpu.dot_dimension_numbers<[1], [0], [0], [1], [0, 0, 1, 1], [], []>} : vector<16x8xbf16>, vector<8x16xbf16>, vector<16x16xf32> -> vector<16x16xf32>
    %c2_i32 = arith.constant 2 : i32
    %55 = tpu.dynamic_rotate %54 by %c2_i32 dim 0 : vector<16x16xf32>, i32 -> vector<16x16xf32>
    %56 = tpu.iota {dimensions = array<i32: 0>} : vector<16x16xi32>
    %c2_i32_41 = arith.constant 2 : i32
    %57 = vector.broadcast %c2_i32_41 : i32 to vector<16x16xi32>
    %58 = arith.cmpi sge, %56, %57 : vector<16x16xi32>
    %cst_42 = arith.constant 0.000000e+00 : f32
    %59 = vector.broadcast %cst_42 : f32 to vector<16x16xf32>
    %60 = arith.select %58, %55, %59 : vector<16x16xi1>, vector<16x16xf32>
    %61 = arith.addf %51, %60 : vector<16x16xf32>
    %c0_43 = arith.constant 0 : index
    %c0_44 = arith.constant 0 : index
    %62 = vector.load %arg9[%c0_43, %c0_44] : memref<1x16xf32, #tpu.memory_space<vmem>>, vector<1x16xf32>
    %63 = vector.broadcast %62 : vector<1x16xf32> to vector<16x16xf32>
    %64 = arith.addf %61, %63 : vector<16x16xf32>
    %cst_45 = arith.constant 0.000000e+00 : f32
    %65 = vector.broadcast %cst_45 : f32 to vector<16x16xf32>
    %66 = arith.maximumf %64, %65 : vector<16x16xf32>
    %67 = arith.truncf %66 : vector<16x16xf32> to vector<16x16xbf16>
    %c1_46 = arith.constant 1 : index
    %c0_47 = arith.constant 0 : index
    %c0_48 = arith.constant 0 : index
    %68 = vector.load %arg10[%c1_46, %c0_47, %c0_48] : memref<2x16x16xbf16, #tpu.memory_space<vmem>>, vector<1x16x16xbf16>
    %69 = vector.shape_cast %68 : vector<1x16x16xbf16> to vector<16x16xbf16>
    %cst_49 = arith.constant dense<0.000000e+00> : vector<16x16xf32>
    %70 = tpu.matmul %67, %69, %cst_49 {dimension_numbers = #tpu.dot_dimension_numbers<[1], [0], [0], [1], [0, 0, 1, 1], [], []>} : vector<16x16xbf16>, vector<16x16xbf16>, vector<16x16xf32> -> vector<16x16xf32>
    %c0_50 = arith.constant 0 : index
    %c0_51 = arith.constant 0 : index
    %c0_52 = arith.constant 0 : index
    %71 = vector.load %arg10[%c0_50, %c0_51, %c0_52] : memref<2x16x16xbf16, #tpu.memory_space<vmem>>, vector<1x16x16xbf16>
    %72 = vector.shape_cast %71 : vector<1x16x16xbf16> to vector<16x16xbf16>
    %cst_53 = arith.constant dense<0.000000e+00> : vector<16x16xf32>
    %73 = tpu.matmul %67, %72, %cst_53 {dimension_numbers = #tpu.dot_dimension_numbers<[1], [0], [0], [1], [0, 0, 1, 1], [], []>} : vector<16x16xbf16>, vector<16x16xbf16>, vector<16x16xf32> -> vector<16x16xf32>
    %c2_i32_54 = arith.constant 2 : i32
    %74 = tpu.dynamic_rotate %73 by %c2_i32_54 dim 0 : vector<16x16xf32>, i32 -> vector<16x16xf32>
    %75 = tpu.iota {dimensions = array<i32: 0>} : vector<16x16xi32>
    %c2_i32_55 = arith.constant 2 : i32
    %76 = vector.broadcast %c2_i32_55 : i32 to vector<16x16xi32>
    %77 = arith.cmpi sge, %75, %76 : vector<16x16xi32>
    %cst_56 = arith.constant 0.000000e+00 : f32
    %78 = vector.broadcast %cst_56 : f32 to vector<16x16xf32>
    %79 = arith.select %77, %74, %78 : vector<16x16xi1>, vector<16x16xf32>
    %80 = arith.addf %70, %79 : vector<16x16xf32>
    %c0_57 = arith.constant 0 : index
    %c0_58 = arith.constant 0 : index
    %81 = vector.load %arg11[%c0_57, %c0_58] : memref<1x16xf32, #tpu.memory_space<vmem>>, vector<1x16xf32>
    %82 = vector.broadcast %81 : vector<1x16xf32> to vector<16x16xf32>
    %83 = arith.addf %80, %82 : vector<16x16xf32>
    %cst_59 = arith.constant 0.000000e+00 : f32
    %84 = vector.broadcast %cst_59 : f32 to vector<16x16xf32>
    %85 = arith.maximumf %83, %84 : vector<16x16xf32>
    %c0_60 = arith.constant 0 : index
    %c0_61 = arith.constant 0 : index
    %86 = vector.load %arg12[%c0_60, %c0_61] : memref<8x16xbf16, #tpu.memory_space<vmem>>, vector<8x16xbf16>
    %cst_62 = arith.constant dense<0.000000e+00> : vector<16x16xf32>
    %87 = tpu.matmul %48, %86, %cst_62 {dimension_numbers = #tpu.dot_dimension_numbers<[1], [0], [0], [1], [0, 0, 1, 1], [], []>} : vector<16x8xbf16>, vector<8x16xbf16>, vector<16x16xf32> -> vector<16x16xf32>
    %c0_63 = arith.constant 0 : index
    %c0_64 = arith.constant 0 : index
    %88 = vector.load %arg13[%c0_63, %c0_64] : memref<1x16xf32, #tpu.memory_space<vmem>>, vector<1x16xf32>
    %89 = vector.broadcast %88 : vector<1x16xf32> to vector<16x16xf32>
    %90 = arith.addf %87, %89 : vector<16x16xf32>
    %91 = arith.addf %85, %90 : vector<16x16xf32>
    %cst_65 = arith.constant 0.000000e+00 : f32
    %92 = vector.broadcast %cst_65 : f32 to vector<16x16xf32>
    %93 = arith.maximumf %91, %92 : vector<16x16xf32>
    %c0_66 = arith.constant 0 : index
    %c0_67 = arith.constant 0 : index
    %c0_68 = arith.constant 0 : index
    %94 = vector.load %arg14[%c0_66, %c0_67, %c0_68] : memref<1x16x16xf32, #tpu.memory_space<vmem>>, vector<1x16x16xf32>
    %95 = vector.shape_cast %94 : vector<1x16x16xf32> to vector<16x16xf32>
    %96 = vector.shape_cast %93 : vector<16x16xf32> to vector<1x16x16xf32>
    tpu.vector_store %arg14[%c0_66, %c0_67, %c0_68], %96 {strides = array<i32>} : memref<1x16x16xf32, #tpu.memory_space<vmem>>, vector<1x16x16xf32>,
    return
  }
  func.func @transform_0(%arg0: i32) -> (i32, i32, i32) {
    %c0_i32 = arith.constant 0 : i32
    %c0_i32_0 = arith.constant 0 : i32
    %c0_i32_1 = arith.constant 0 : i32
    return %arg0, %c0_i32, %c0_i32_0 : i32, i32, i32
  }
  func.func @transform_1(%arg0: i32) -> (i32, i32, i32) {
    %c0_i32 = arith.constant 0 : i32
    %c0_i32_0 = arith.constant 0 : i32
    %c0_i32_1 = arith.constant 0 : i32
    %c0_i32_2 = arith.constant 0 : i32
    return %c0_i32, %c0_i32_0, %c0_i32_1 : i32, i32, i32
  }
  func.func @transform_2(%arg0: i32) -> (i32, i32) {
    %c0_i32 = arith.constant 0 : i32
    %c0_i32_0 = arith.constant 0 : i32
    %c0_i32_1 = arith.constant 0 : i32
    return %c0_i32, %c0_i32_0 : i32, i32
  }
  func.func @transform_3(%arg0: i32) -> (i32, i32, i32) {
    %c0_i32 = arith.constant 0 : i32
    %c0_i32_0 = arith.constant 0 : i32
    %c0_i32_1 = arith.constant 0 : i32
    %c0_i32_2 = arith.constant 0 : i32
    return %c0_i32, %c0_i32_0, %c0_i32_1 : i32, i32, i32
  }
  func.func @transform_4(%arg0: i32) -> (i32, i32) {
    %c0_i32 = arith.constant 0 : i32
    %c0_i32_0 = arith.constant 0 : i32
    %c0_i32_1 = arith.constant 0 : i32
    return %c0_i32, %c0_i32_0 : i32, i32
  }
  func.func @transform_5(%arg0: i32) -> (i32, i32) {
    %c0_i32 = arith.constant 0 : i32
    %c0_i32_0 = arith.constant 0 : i32
    %c0_i32_1 = arith.constant 0 : i32
    return %c0_i32, %c0_i32_0 : i32, i32
  }
  func.func @transform_6(%arg0: i32) -> (i32, i32) {
    %c0_i32 = arith.constant 0 : i32
    %c0_i32_0 = arith.constant 0 : i32
    %c0_i32_1 = arith.constant 0 : i32
    return %c0_i32, %c0_i32_0 : i32, i32
  }
  func.func @transform_7(%arg0: i32) -> (i32, i32, i32) {
    %c0_i32 = arith.constant 0 : i32
    %c0_i32_0 = arith.constant 0 : i32
    %c0_i32_1 = arith.constant 0 : i32
    %c0_i32_2 = arith.constant 0 : i32
    return %c0_i32, %c0_i32_0, %c0_i32_1 : i32, i32, i32
  }
  func.func @transform_8(%arg0: i32) -> (i32, i32) {
    %c0_i32 = arith.constant 0 : i32
    %c0_i32_0 = arith.constant 0 : i32
    %c0_i32_1 = arith.constant 0 : i32
    return %c0_i32, %c0_i32_0 : i32, i32
  }
  func.func @transform_9(%arg0: i32) -> (i32, i32, i32) {
    %c0_i32 = arith.constant 0 : i32
    %c0_i32_0 = arith.constant 0 : i32
    %c0_i32_1 = arith.constant 0 : i32
    %c0_i32_2 = arith.constant 0 : i32
    return %c0_i32, %c0_i32_0, %c0_i32_1 : i32, i32, i32
  }
  func.func @transform_10(%arg0: i32) -> (i32, i32) {
    %c0_i32 = arith.constant 0 : i32
    %c0_i32_0 = arith.constant 0 : i32
    %c0_i32_1 = arith.constant 0 : i32
    return %c0_i32, %c0_i32_0 : i32, i32
  }
  func.func @transform_11(%arg0: i32) -> (i32, i32) {
    %c0_i32 = arith.constant 0 : i32
    %c0_i32_0 = arith.constant 0 : i32
    %c0_i32_1 = arith.constant 0 : i32
    return %c0_i32, %c0_i32_0 : i32, i32
  }
  func.func @transform_12(%arg0: i32) -> (i32, i32) {
    %c0_i32 = arith.constant 0 : i32
    %c0_i32_0 = arith.constant 0 : i32
    %c0_i32_1 = arith.constant 0 : i32
    return %c0_i32, %c0_i32_0 : i32, i32
  }
  func.func @transform_13(%arg0: i32) -> (i32, i32, i32) {
    %c0_i32 = arith.constant 0 : i32
    %c0_i32_0 = arith.constant 0 : i32
    %c0_i32_1 = arith.constant 0 : i32
    return %arg0, %c0_i32, %c0_i32_0 : i32, i32, i32
  }
}

</mosaic_0001>

<llo_original>
// kernel: tpu_custom_call.1
$region0: #{tpu_custom_call.1}
  #allocation0 [shape = 'u32[]', space=smem, size = 0x4, offset = 0x4, fixed_abs, tag = 'smem constant byte address 0x4 - core index']
  #allocation1 [shape = 'u32[144,128]{1,0:T(1,128)}', space=vmem, size = 0x12000, scoped, tag = 'internal scratch']
  %s0 = inlined_call_operand.vmem [shape: f32[2,16,4], index: 0, kind: input, shape index: {}]
  %s1 = inlined_call_operand.vmem [shape: bf16[2,4,8], index: 1, kind: input, shape index: {}]
  %s2 = inlined_call_operand.vmem [shape: f32[1,8], index: 2, kind: input, shape index: {}]
  %s3 = inlined_call_operand.vmem [shape: bf16[2,8,8], index: 3, kind: input, shape index: {}]
  %s4 = inlined_call_operand.vmem [shape: f32[1,8], index: 4, kind: input, shape index: {}]
  %s5 = inlined_call_operand.vmem [shape: bf16[4,8], index: 5, kind: input, shape index: {}]
  %s6 = inlined_call_operand.vmem [shape: f32[1,8], index: 6, kind: input, shape index: {}]
  %s7 = inlined_call_operand.vmem [shape: bf16[2,8,16], index: 7, kind: input, shape index: {}]
  %s8 = inlined_call_operand.vmem [shape: f32[1,16], index: 8, kind: input, shape index: {}]
  %s9 = inlined_call_operand.vmem [shape: bf16[2,16,16], index: 9, kind: input, shape index: {}]
  %s10 = inlined_call_operand.vmem [shape: f32[1,16], index: 10, kind: input, shape index: {}]
  %s11 = inlined_call_operand.vmem [shape: bf16[8,16], index: 11, kind: input, shape index: {}]
  %s12 = inlined_call_operand.vmem [shape: f32[1,16], index: 12, kind: input, shape index: {}]
  %s13 = inlined_call_operand.hbm [shape: f32[2,16,16], index: 13, kind: output, shape index: {}]
  %s14 = sld [smem:[#allocation0]]
  $region85: #{tpu_custom_call.1} parent=0
    _
  %s16 = ssub.s32 1, %s14
  %s17 = scalar_select 0, %s16, %s14
  $region1: #{tpu_custom_call.1} parent=0
    #allocation2 [shape = 'u8[16384]{0}', space=vmem, size = 0x4000, scoped, tag = 'output window, operand 0']
    #allocation3 [shape = 's32[2]{0}', space=sflag, size = 0x8, scoped, tag = 'scoped memory for tpu_custom_call.1']
    %18 = vsyncpa [#allocation3], 0
    %s19 = scalar_lea.sflag [#allocation3], 1
    %20 = vsyncpa %s19, 0
    loop: start=0, step=1, limit=4
    $region2: #{tpu_custom_call.1} parent=1 // loop_pre_header
      _
    $region3: #{tpu_custom_call.1} parent=1 // loop_header
      %s22 = sphi 0, %s26
      %p23 = scmp.ge.s32.totalorder %s22, 4
      %s32 = sphi 0, %s34
      %s35 = sphi 0, %s32
      %s36 = sphi 0, %s35
      %s52 = sphi 0, %s36
      %s56 = sphi 0, %s56
      %s58 = sphi 0, %s56
      %s59 = sphi 0, %s58
      %s73 = sphi 0, %s59
      %s77 = sphi 0, %s77
      %s79 = sphi 0, %s77
      %s80 = sphi 0, %s79
      %s94 = sphi 0, %s80
      %s98 = sphi 0, %s98
      %s100 = sphi 0, %s98
      %s101 = sphi 0, %s100
      %s115 = sphi 0, %s101
      %s119 = sphi 0, %s119
      %s121 = sphi 0, %s119
      %s122 = sphi 0, %s121
      %s136 = sphi 0, %s122
      %s140 = sphi 0, %s140
      %s142 = sphi 0, %s140
      %s143 = sphi 0, %s142
      %s157 = sphi 0, %s143
      %s161 = sphi 0, %s161
      %s163 = sphi 0, %s161
      %s164 = sphi 0, %s163
      %s178 = sphi 0, %s164
      %s182 = sphi 0, %s182
      %s184 = sphi 0, %s182
      %s185 = sphi 0, %s184
      %s199 = sphi 0, %s185
      %s203 = sphi 0, %s203
      %s205 = sphi 0, %s203
      %s206 = sphi 0, %s205
      %s220 = sphi 0, %s206
      %s224 = sphi 0, %s224
      %s226 = sphi 0, %s224
      %s227 = sphi 0, %s226
      %s241 = sphi 0, %s227
      %s245 = sphi 0, %s245
      %s247 = sphi 0, %s245
      %s248 = sphi 0, %s247
      %s262 = sphi 0, %s248
      %s266 = sphi 0, %s266
      %s268 = sphi 0, %s266
      %s269 = sphi 0, %s268
      %s283 = sphi 0, %s269
      %s287 = sphi 0, %s287
      %s289 = sphi 0, %s287
      %s290 = sphi 0, %s289
      %s304 = sphi 0, %s290
      %s310 = sphi 0, %s312
      %s313 = sphi 0, %s310
      %s314 = sphi 0, %s313
      %s330 = sphi 0, %s314
    $region4: #{tpu_custom_call.1} parent=1 // loop_header_branch
      %25 = sbr.rel (%p23) target = $region8
    $region5: #{tpu_custom_call.1} parent=1 // loop_body
      %s27 = ssub.s32 %s22, 1
      %s28 = ssub.s32 %s22, 2
      %s29 = sadd.s32 %s22, 1
      %s30 = ssub.s32 %s22, %s29
      %p31 = scmp.eq.s32.totalorder %s30, 0
      %s33 = sadd.s32 %s32, 1
      %s34 = scalar_select %p31, %s32, %s33
      %p37 = pneg %p31
      %p38 = scmp.eq.s32.totalorder %s22, 1
      %p39 = por %p37, %p38
      %p40 = scmp.ne.s32.totalorder %s32, %s35
      %p41 = scmp.eq.s32.totalorder %s22, 0
      %p42 = por %p40, %p41
      %p43 = scmp.ne.s32.totalorder %s32, %s35
      %p44 = scmp.eq.s32.totalorder %s27, 1
      %p45 = por %p43, %p44
      %p46 = scmp.ne.s32.totalorder %s35, %s36
      %p47 = scmp.eq.s32.totalorder %s27, 0
      %p48 = por %p46, %p47
      %p49 = scmp.ne.s32.totalorder %s35, %s36
      %p50 = scmp.eq.s32.totalorder %s28, 1
      %p51 = por %p49, %p50
      %p53 = scmp.ne.s32.totalorder %s36, %s52
      %p54 = scmp.eq.s32.totalorder %s28, 0
      %p55 = por %p53, %p54
      %s57 = sadd.s32 %s56, 1
      %p60 = scmp.eq.s32.totalorder %s22, 1
      %p61 = scmp.ne.s32.totalorder %s56, %s58
      %p62 = scmp.eq.s32.totalorder %s22, 0
      %p63 = por %p61, %p62
      %p64 = scmp.ne.s32.totalorder %s56, %s58
      %p65 = scmp.eq.s32.totalorder %s27, 1
      %p66 = por %p64, %p65
      %p67 = scmp.ne.s32.totalorder %s58, %s59
      %p68 = scmp.eq.s32.totalorder %s27, 0
      %p69 = por %p67, %p68
      %p70 = scmp.ne.s32.totalorder %s58, %s59
      %p71 = scmp.eq.s32.totalorder %s28, 1
      %p72 = por %p70, %p71
      %p74 = scmp.ne.s32.totalorder %s59, %s73
      %p75 = scmp.eq.s32.totalorder %s28, 0
      %p76 = por %p74, %p75
      %s78 = sadd.s32 %s77, 1
      %p81 = scmp.eq.s32.totalorder %s22, 1
      %p82 = scmp.ne.s32.totalorder %s77, %s79
      %p83 = scmp.eq.s32.totalorder %s22, 0
      %p84 = por %p82, %p83
      %p85 = scmp.ne.s32.totalorder %s77, %s79
      %p86 = scmp.eq.s32.totalorder %s27, 1
      %p87 = por %p85, %p86
      %p88 = scmp.ne.s32.totalorder %s79, %s80
      %p89 = scmp.eq.s32.totalorder %s27, 0
      %p90 = por %p88, %p89
      %p91 = scmp.ne.s32.totalorder %s79, %s80
      %p92 = scmp.eq.s32.totalorder %s28, 1
      %p93 = por %p91, %p92
      %p95 = scmp.ne.s32.totalorder %s80, %s94
      %p96 = scmp.eq.s32.totalorder %s28, 0
      %p97 = por %p95, %p96
      %s99 = sadd.s32 %s98, 1
      %p102 = scmp.eq.s32.totalorder %s22, 1
      %p103 = scmp.ne.s32.totalorder %s98, %s100
      %p104 = scmp.eq.s32.totalorder %s22, 0
      %p105 = por %p103, %p104
      %p106 = scmp.ne.s32.totalorder %s98, %s100
      %p107 = scmp.eq.s32.totalorder %s27, 1
      %p108 = por %p106, %p107
      %p109 = scmp.ne.s32.totalorder %s100, %s101
      %p110 = scmp.eq.s32.totalorder %s27, 0
      %p111 = por %p109, %p110
      %p112 = scmp.ne.s32.totalorder %s100, %s101
      %p113 = scmp.eq.s32.totalorder %s28, 1
      %p114 = por %p112, %p113
      %p116 = scmp.ne.s32.totalorder %s101, %s115
      %p117 = scmp.eq.s32.totalorder %s28, 0
      %p118 = por %p116, %p117
      %s120 = sadd.s32 %s119, 1
      %p123 = scmp.eq.s32.totalorder %s22, 1
      %p124 = scmp.ne.s32.totalorder %s119, %s121
      %p125 = scmp.eq.s32.totalorder %s22, 0
      %p126 = por %p124, %p125
      %p127 = scmp.ne.s32.totalorder %s119, %s121
      %p128 = scmp.eq.s32.totalorder %s27, 1
      %p129 = por %p127, %p128
      %p130 = scmp.ne.s32.totalorder %s121, %s122
      %p131 = scmp.eq.s32.totalorder %s27, 0
      %p132 = por %p130, %p131
      %p133 = scmp.ne.s32.totalorder %s121, %s122
      %p134 = scmp.eq.s32.totalorder %s28, 1
      %p135 = por %p133, %p134
      %p137 = scmp.ne.s32.totalorder %s122, %s136
      %p138 = scmp.eq.s32.totalorder %s28, 0
      %p139 = por %p137, %p138
      %s141 = sadd.s32 %s140, 1
      %p144 = scmp.eq.s32.totalorder %s22, 1
      %p145 = scmp.ne.s32.totalorder %s140, %s142
      %p146 = scmp.eq.s32.totalorder %s22, 0
      %p147 = por %p145, %p146
      %p148 = scmp.ne.s32.totalorder %s140, %s142
      %p149 = scmp.eq.s32.totalorder %s27, 1
      %p150 = por %p148, %p149
      %p151 = scmp.ne.s32.totalorder %s142, %s143
      %p152 = scmp.eq.s32.totalorder %s27, 0
      %p153 = por %p151, %p152
      %p154 = scmp.ne.s32.totalorder %s142, %s143
      %p155 = scmp.eq.s32.totalorder %s28, 1
      %p156 = por %p154, %p155
      %p158 = scmp.ne.s32.totalorder %s143, %s157
      %p159 = scmp.eq.s32.totalorder %s28, 0
      %p160 = por %p158, %p159
      %s162 = sadd.s32 %s161, 1
      %p165 = scmp.eq.s32.totalorder %s22, 1
      %p166 = scmp.ne.s32.totalorder %s161, %s163
      %p167 = scmp.eq.s32.totalorder %s22, 0
      %p168 = por %p166, %p167
      %p169 = scmp.ne.s32.totalorder %s161, %s163
      %p170 = scmp.eq.s32.totalorder %s27, 1
      %p171 = por %p169, %p170
      %p172 = scmp.ne.s32.totalorder %s163, %s164
      %p173 = scmp.eq.s32.totalorder %s27, 0
      %p174 = por %p172, %p173
      %p175 = scmp.ne.s32.totalorder %s163, %s164
      %p176 = scmp.eq.s32.totalorder %s28, 1
      %p177 = por %p175, %p176
      %p179 = scmp.ne.s32.totalorder %s164, %s178
      %p180 = scmp.eq.s32.totalorder %s28, 0
      %p181 = por %p179, %p180
      %s183 = sadd.s32 %s182, 1
      %p186 = scmp.eq.s32.totalorder %s22, 1
      %p187 = scmp.ne.s32.totalorder %s182, %s184
      %p188 = scmp.eq.s32.totalorder %s22, 0
      %p189 = por %p187, %p188
      %p190 = scmp.ne.s32.totalorder %s182, %s184
      %p191 = scmp.eq.s32.totalorder %s27, 1
      %p192 = por %p190, %p191
      %p193 = scmp.ne.s32.totalorder %s184, %s185
      %p194 = scmp.eq.s32.totalorder %s27, 0
      %p195 = por %p193, %p194
      %p196 = scmp.ne.s32.totalorder %s184, %s185
      %p197 = scmp.eq.s32.totalorder %s28, 1
      %p198 = por %p196, %p197
      %p200 = scmp.ne.s32.totalorder %s185, %s199
      %p201 = scmp.eq.s32.totalorder %s28, 0
      %p202 = por %p200, %p201
      %s204 = sadd.s32 %s203, 1
      %p207 = scmp.eq.s32.totalorder %s22, 1
      %p208 = scmp.ne.s32.totalorder %s203, %s205
      %p209 = scmp.eq.s32.totalorder %s22, 0
      %p210 = por %p208, %p209
      %p211 = scmp.ne.s32.totalorder %s203, %s205
      %p212 = scmp.eq.s32.totalorder %s27, 1
      %p213 = por %p211, %p212
      %p214 = scmp.ne.s32.totalorder %s205, %s206
      %p215 = scmp.eq.s32.totalorder %s27, 0
      %p216 = por %p214, %p215
      %p217 = scmp.ne.s32.totalorder %s205, %s206
      %p218 = scmp.eq.s32.totalorder %s28, 1
      %p219 = por %p217, %p218
      %p221 = scmp.ne.s32.totalorder %s206, %s220
      %p222 = scmp.eq.s32.totalorder %s28, 0
      %p223 = por %p221, %p222
      %s225 = sadd.s32 %s224, 1
      %p228 = scmp.eq.s32.totalorder %s22, 1
      %p229 = scmp.ne.s32.totalorder %s224, %s226
      %p230 = scmp.eq.s32.totalorder %s22, 0
      %p231 = por %p229, %p230
      %p232 = scmp.ne.s32.totalorder %s224, %s226
      %p233 = scmp.eq.s32.totalorder %s27, 1
      %p234 = por %p232, %p233
      %p235 = scmp.ne.s32.totalorder %s226, %s227
      %p236 = scmp.eq.s32.totalorder %s27, 0
      %p237 = por %p235, %p236
      %p238 = scmp.ne.s32.totalorder %s226, %s227
      %p239 = scmp.eq.s32.totalorder %s28, 1
      %p240 = por %p238, %p239
      %p242 = scmp.ne.s32.totalorder %s227, %s241
      %p243 = scmp.eq.s32.totalorder %s28, 0
      %p244 = por %p242, %p243
      %s246 = sadd.s32 %s245, 1
      %p249 = scmp.eq.s32.totalorder %s22, 1
      %p250 = scmp.ne.s32.totalorder %s245, %s247
      %p251 = scmp.eq.s32.totalorder %s22, 0
      %p252 = por %p250, %p251
      %p253 = scmp.ne.s32.totalorder %s245, %s247
      %p254 = scmp.eq.s32.totalorder %s27, 1
      %p255 = por %p253, %p254
      %p256 = scmp.ne.s32.totalorder %s247, %s248
      %p257 = scmp.eq.s32.totalorder %s27, 0
      %p258 = por %p256, %p257
      %p259 = scmp.ne.s32.totalorder %s247, %s248
      %p260 = scmp.eq.s32.totalorder %s28, 1
      %p261 = por %p259, %p260
      %p263 = scmp.ne.s32.totalorder %s248, %s262
      %p264 = scmp.eq.s32.totalorder %s28, 0
      %p265 = por %p263, %p264
      %s267 = sadd.s32 %s266, 1
      %p270 = scmp.eq.s32.totalorder %s22, 1
      %p271 = scmp.ne.s32.totalorder %s266, %s268
      %p272 = scmp.eq.s32.totalorder %s22, 0
      %p273 = por %p271, %p272
      %p274 = scmp.ne.s32.totalorder %s266, %s268
      %p275 = scmp.eq.s32.totalorder %s27, 1
      %p276 = por %p274, %p275
      %p277 = scmp.ne.s32.totalorder %s268, %s269
      %p278 = scmp.eq.s32.totalorder %s27, 0
      %p279 = por %p277, %p278
      %p280 = scmp.ne.s32.totalorder %s268, %s269
      %p281 = scmp.eq.s32.totalorder %s28, 1
      %p282 = por %p280, %p281
      %p284 = scmp.ne.s32.totalorder %s269, %s283
      %p285 = scmp.eq.s32.totalorder %s28, 0
      %p286 = por %p284, %p285
      %s288 = sadd.s32 %s287, 1
      %p291 = scmp.eq.s32.totalorder %s22, 1
      %p292 = scmp.ne.s32.totalorder %s287, %s289
      %p293 = scmp.eq.s32.totalorder %s22, 0
      %p294 = por %p292, %p293
      %p295 = scmp.ne.s32.totalorder %s287, %s289
      %p296 = scmp.eq.s32.totalorder %s27, 1
      %p297 = por %p295, %p296
      %p298 = scmp.ne.s32.totalorder %s289, %s290
      %p299 = scmp.eq.s32.totalorder %s27, 0
      %p300 = por %p298, %p299
      %p301 = scmp.ne.s32.totalorder %s289, %s290
      %p302 = scmp.eq.s32.totalorder %s28, 1
      %p303 = por %p301, %p302
      %p305 = scmp.ne.s32.totalorder %s290, %s304
      %p306 = scmp.eq.s32.totalorder %s28, 0
      %p307 = por %p305, %p306
      %s308 = ssub.s32 %s22, %s29
      %p309 = scmp.eq.s32.totalorder %s308, 0
      %s311 = sadd.s32 %s310, 1
      %s312 = scalar_select %p309, %s310, %s311
      %p315 = pneg %p309
      %p316 = scmp.eq.s32.totalorder %s22, 1
      %p317 = por %p315, %p316
      %p318 = scmp.ne.s32.totalorder %s310, %s313
      %p319 = scmp.eq.s32.totalorder %s22, 0
      %p320 = por %p318, %p319
      %p321 = scmp.ne.s32.totalorder %s310, %s313
      %p322 = scmp.eq.s32.totalorder %s27, 1
      %p323 = por %p321, %p322
      %p324 = scmp.ne.s32.totalorder %s313, %s314
      %p325 = scmp.eq.s32.totalorder %s27, 0
      %p326 = por %p324, %p325
      %p327 = scmp.ne.s32.totalorder %s313, %s314
      %p328 = scmp.eq.s32.totalorder %s28, 1
      %p329 = por %p327, %p328
      %p331 = scmp.ne.s32.totalorder %s314, %s330
      %p332 = scmp.eq.s32.totalorder %s28, 0
      %p333 = por %p331, %p332
      %p334 = scmp.le.s32.totalorder 1, %s22
      %p335 = scmp.lt.s32.totalorder %s22, 3
      %p336 = pnand %p334, %p335
      %p337 = pneg %p336
      // Predicated region
      $region9: #{tpu_custom_call.1} parent=5 // pred_check
        _
      $region10: #{tpu_custom_call.1} parent=5 // pred_check_branch
        %339 = sbr.rel (%p336) target = $region12
      $region11: #{tpu_custom_call.1} parent=5 // pred_region
        %s340 = ssub.s32 %s22, 1
        // Predicated region
        $region13: #{tpu_custom_call.1} parent=11 // pred_check
          %p341 = pneg %p69
        $region14: #{tpu_custom_call.1} parent=11 // pred_check_branch
          %343 = sbr.rel (%p341) target = $region16
        $region15: #{tpu_custom_call.1} parent=11 // pred_region
          _
        $region16: #{tpu_custom_call.1} parent=11 // pred_fallthru
          _
        // Predicated region
        $region17: #{tpu_custom_call.1} parent=11 // pred_check
          %p344 = pneg %p90
        $region18: #{tpu_custom_call.1} parent=11 // pred_check_branch
          %346 = sbr.rel (%p344) target = $region20
        $region19: #{tpu_custom_call.1} parent=11 // pred_region
          _
        $region20: #{tpu_custom_call.1} parent=11 // pred_fallthru
          _
        // Predicated region
        $region21: #{tpu_custom_call.1} parent=11 // pred_check
          %p347 = pneg %p111
        $region22: #{tpu_custom_call.1} parent=11 // pred_check_branch
          %349 = sbr.rel (%p347) target = $region24
        $region23: #{tpu_custom_call.1} parent=11 // pred_region
          _
        $region24: #{tpu_custom_call.1} parent=11 // pred_fallthru
          _
        // Predicated region
        $region25: #{tpu_custom_call.1} parent=11 // pred_check
          %p350 = pneg %p132
        $region26: #{tpu_custom_call.1} parent=11 // pred_check_branch
          %352 = sbr.rel (%p350) target = $region28
        $region27: #{tpu_custom_call.1} parent=11 // pred_region
          _
        $region28: #{tpu_custom_call.1} parent=11 // pred_fallthru
          _
        // Predicated region
        $region29: #{tpu_custom_call.1} parent=11 // pred_check
          %p353 = pneg %p153
        $region30: #{tpu_custom_call.1} parent=11 // pred_check_branch
          %355 = sbr.rel (%p353) target = $region32
        $region31: #{tpu_custom_call.1} parent=11 // pred_region
          _
        $region32: #{tpu_custom_call.1} parent=11 // pred_fallthru
          _
        // Predicated region
        $region33: #{tpu_custom_call.1} parent=11 // pred_check
          %p356 = pneg %p174
        $region34: #{tpu_custom_call.1} parent=11 // pred_check_branch
          %358 = sbr.rel (%p356) target = $region36
        $region35: #{tpu_custom_call.1} parent=11 // pred_region
          _
        $region36: #{tpu_custom_call.1} parent=11 // pred_fallthru
          _
        // Predicated region
        $region37: #{tpu_custom_call.1} parent=11 // pred_check
          %p359 = pneg %p195
        $region38: #{tpu_custom_call.1} parent=11 // pred_check_branch
          %361 = sbr.rel (%p359) target = $region40
        $region39: #{tpu_custom_call.1} parent=11 // pred_region
          _
        $region40: #{tpu_custom_call.1} parent=11 // pred_fallthru
          _
        // Predicated region
        $region41: #{tpu_custom_call.1} parent=11 // pred_check
          %p362 = pneg %p216
        $region42: #{tpu_custom_call.1} parent=11 // pred_check_branch
          %364 = sbr.rel (%p362) target = $region44
        $region43: #{tpu_custom_call.1} parent=11 // pred_region
          _
        $region44: #{tpu_custom_call.1} parent=11 // pred_fallthru
          _
        // Predicated region
        $region45: #{tpu_custom_call.1} parent=11 // pred_check
          %p365 = pneg %p237
        $region46: #{tpu_custom_call.1} parent=11 // pred_check_branch
          %367 = sbr.rel (%p365) target = $region48
        $region47: #{tpu_custom_call.1} parent=11 // pred_region
          _
        $region48: #{tpu_custom_call.1} parent=11 // pred_fallthru
          _
        // Predicated region
        $region49: #{tpu_custom_call.1} parent=11 // pred_check
          %p368 = pneg %p258
        $region50: #{tpu_custom_call.1} parent=11 // pred_check_branch
          %370 = sbr.rel (%p368) target = $region52
        $region51: #{tpu_custom_call.1} parent=11 // pred_region
          _
        $region52: #{tpu_custom_call.1} parent=11 // pred_fallthru
          _
        // Predicated region
        $region53: #{tpu_custom_call.1} parent=11 // pred_check
          %p371 = pneg %p279
        $region54: #{tpu_custom_call.1} parent=11 // pred_check_branch
          %373 = sbr.rel (%p371) target = $region56
        $region55: #{tpu_custom_call.1} parent=11 // pred_region
          _
        $region56: #{tpu_custom_call.1} parent=11 // pred_fallthru
          _
        // Predicated region
        $region57: #{tpu_custom_call.1} parent=11 // pred_check
          %p374 = pneg %p300
        $region58: #{tpu_custom_call.1} parent=11 // pred_check_branch
          %376 = sbr.rel (%p374) target = $region60
        $region59: #{tpu_custom_call.1} parent=11 // pred_region
          _
        $region60: #{tpu_custom_call.1} parent=11 // pred_fallthru
          _
      $region12: #{tpu_custom_call.1} parent=5 // pred_fallthru
        _
      %p377 = scmp.lt.s32.totalorder %s22, 2
      // Predicated region
      $region61: #{tpu_custom_call.1} parent=5 // pred_check
        %p378 = pneg %p377
      $region62: #{tpu_custom_call.1} parent=5 // pred_check_branch
        %380 = sbr.rel (%p378) target = $region64
      $region63: #{tpu_custom_call.1} parent=5 // pred_region
        // Predicated region
        $region65: #{tpu_custom_call.1} parent=63 // pred_check
          %p381 = pneg %p42
        $region66: #{tpu_custom_call.1} parent=63 // pred_check_branch
          %383 = sbr.rel (%p381) target = $region68
        $region67: #{tpu_custom_call.1} parent=63 // pred_region
          %p384 = scmp.lt.s32.totalorder %s22, 1
          %s385 = scalar_select %p384, %s22, 1
          %s386 = smul.addr %s385, 2
          %s387 = smul.addr %s386, 8
          %s388 = scalar_lea.vmem %s0, %s387
        $region68: #{tpu_custom_call.1} parent=63 // pred_fallthru
          _
      $region64: #{tpu_custom_call.1} parent=5 // pred_fallthru
        _
      %p389 = scmp.le.s32.totalorder 1, %s22
      %p390 = scmp.lt.s32.totalorder %s22, 3
      %p391 = pnand %p389, %p390
      %p392 = pneg %p391
      // Predicated region
      $region69: #{tpu_custom_call.1} parent=5 // pred_check
        _
      $region70: #{tpu_custom_call.1} parent=5 // pred_check_branch
        %394 = sbr.rel (%p391) target = $region72
      $region71: #{tpu_custom_call.1} parent=5 // pred_region
        %s395 = ssub.s32 %s22, 1
        %p396 = scmp.lt.s32.totalorder %s27, 1
        %s397 = scalar_select %p396, %s27, 1
        %s398 = smul.addr %s397, 2
        %s399 = smul.addr %s398, 8
        %s400 = scalar_lea.vmem %s0, %s399
        %p401 = pneg %p48
        %p402 = pneg %p45
        %p403 = pneg %p69
        %p404 = pneg %p66
        %p405 = pneg %p90
        %p406 = pneg %p87
        %p407 = pneg %p111
        %p408 = pneg %p108
        %p409 = pneg %p132
        %p410 = pneg %p129
        %p411 = pneg %p153
        %p412 = pneg %p150
        %p413 = pneg %p174
        %p414 = pneg %p171
        %p415 = pneg %p195
        %p416 = pneg %p192
        %p417 = pneg %p216
        %p418 = pneg %p213
        %p419 = pneg %p237
        %p420 = pneg %p234
        %p421 = pneg %p258
        %p422 = pneg %p255
        %p423 = pneg %p279
        %p424 = pneg %p276
        %p425 = pneg %p300
        %p426 = pneg %p297
        %p427 = pneg %p326
        %p428 = pneg %p323
        %s429 = sand.u32 %s313, 1
        %s430 = scalar_lea.sflag [#allocation3], %s429
        %s431 = sand.u32 %s313, 1
        %s432 = smul.addr %s431, 16
        %s433 = scalar_lea.vmem [#allocation2], %s432
        %p434 = scmp.lt.s32.totalorder %s27, 1
        %s435 = scalar_select %p434, %s27, 1
        %s436 = smul.addr %s435, 2
        %s437 = smul.addr %s436, 8
        %s438 = scalar_lea.vmem %s0, %s437
        %v440 = vld [vmem:[%s438] sm:$0xff]
        %v441 = vld [vmem:[%s438 + $0x8] sm:$0xff]
        %v442 = vpack.c.bf16 %v441, %v440
        %s443 = scalar_lea.vmem %s1, 2
        %v444 = vld [vmem:[%s443] sm:$0x3]
        %v445 = vld [vmem:[%s1] sm:$0x3]
        %vm446 = vcmask 31744
        %v448 = vsel %vm446, %v442, 0
        %vm450 = vcmask 1041408
        %v452 = vsel %vm450, %v445, 0
        %454 = vmatprep.subr.bf16.mxu0 0
        %455 = vmatpush1.bf16.msra.mxu0 0
        %456 = vmatprep.subr.bf16.mxu0 0
        %457 = vmatpush1.bf16.msra.mxu0 0
        %458 = vmatprep.subr.bf16.mxu0 0
        %459 = vmatpush1.bf16.msra.mxu0 0
        %460 = vmatprep.subr.bf16.mxu0 0
        %461 = vmatpush1.bf16.msra.mxu0 0
        %462 = vmatprep.subr.bf16.mxu0 0
        %463 = vmatpush1.bf16.msra.mxu0 0
        %464 = vmatprep.subr.bf16.mxu0 0
        %465 = vmatpush1.bf16.msra.mxu0 0
        %466 = vmatprep.subr.bf16.mxu0 0
        %467 = vmatpush1.bf16.msra.mxu0 0
        %468 = vmatprep.subr.bf16.mxu0 0
        %469 = vmatpush1.bf16.msra.mxu0 %v452
        %470 = vmatprep.subr.bf16.mxu0 0
        %471 = vmatpush2.bf16.msra.mxu0 0
        %472 = vmatprep.subr.bf16.mxu0 0
        %473 = vmatpush2.bf16.msra.mxu0 0
        %474 = vmatprep.subr.bf16.mxu0 0
        %475 = vmatpush2.bf16.msra.mxu0 0
        %476 = vmatprep.subr.bf16.mxu0 0
        %477 = vmatpush2.bf16.msra.mxu0 0
        %478 = vmatprep.subr.bf16.mxu0 0
        %479 = vmatpush2.bf16.msra.mxu0 0
        %480 = vmatprep.subr.bf16.mxu0 0
        %481 = vmatpush2.bf16.msra.mxu0 0
        %482 = vmatprep.subr.bf16.mxu0 0
        %483 = vmatpush2.bf16.msra.mxu0 0
        %484 = vmatprep.subr.bf16.mxu0 0
        %485 = vmatpush2.bf16.msra.mxu0 0
        %486 = vmatprep.mubr.bf16.mxu0 0
        %487 = vmatmul.mubr.bf16.gmra.mxu0 %v448
        %v488 = vpop.f32.mrf.mxu0
        %v489 = vadd.f32 0.0, %v488
        %v490 = vpop.f32.mrf.mxu0
        %v491 = vpop.f32.mrf.mxu0
        %v492 = vadd.f32 0.0, %v491
        %v493 = vpop.f32.mrf.mxu0
        %494 = vdwg.mxu0
        %v495 = vrot.slane %v489, 7
        %v496 = vrot.slane %v492, 7
        %v497 = vlaneseq
        %v498 = vshrl.u32 %v497, 7
        %vm499 = vcmp.lt.s32.totalorder %v498, 1
        %v500 = vsel %vm499, %v495, %v496
        %v501 = vsel %vm499, %v496, %v495
        %v502 = vadd.s32 %v498, 8
        %vm503 = vcmp.ge.s32.totalorder %v498, 1
        %vm504 = vcmp.ge.s32.totalorder %v502, 1
        %v505 = vsel %vm503, %v501, 0.0
        %v506 = vsel %vm504, %v500, 0.0
        %v508 = vsel %vm450, %v444, 0
        %510 = vmatprep.subr.bf16.mxu0 0
        %511 = vmatpush1.bf16.msra.mxu0 0
        %512 = vmatprep.subr.bf16.mxu0 0
        %513 = vmatpush1.bf16.msra.mxu0 0
        %514 = vmatprep.subr.bf16.mxu0 0
        %515 = vmatpush1.bf16.msra.mxu0 0
        %516 = vmatprep.subr.bf16.mxu0 0
        %517 = vmatpush1.bf16.msra.mxu0 0
        %518 = vmatprep.subr.bf16.mxu0 0
        %519 = vmatpush1.bf16.msra.mxu0 0
        %520 = vmatprep.subr.bf16.mxu0 0
        %521 = vmatpush1.bf16.msra.mxu0 0
        %522 = vmatprep.subr.bf16.mxu0 0
        %523 = vmatpush1.bf16.msra.mxu0 0
        %524 = vmatprep.subr.bf16.mxu0 0
        %525 = vmatpush1.bf16.msra.mxu0 %v508
        %526 = vmatprep.subr.bf16.mxu0 0
        %527 = vmatpush2.bf16.msra.mxu0 0
        %528 = vmatprep.subr.bf16.mxu0 0
        %529 = vmatpush2.bf16.msra.mxu0 0
        %530 = vmatprep.subr.bf16.mxu0 0
        %531 = vmatpush2.bf16.msra.mxu0 0
        %532 = vmatprep.subr.bf16.mxu0 0
        %533 = vmatpush2.bf16.msra.mxu0 0
        %534 = vmatprep.subr.bf16.mxu0 0
        %535 = vmatpush2.bf16.msra.mxu0 0
        %536 = vmatprep.subr.bf16.mxu0 0
        %537 = vmatpush2.bf16.msra.mxu0 0
        %538 = vmatprep.subr.bf16.mxu0 0
        %539 = vmatpush2.bf16.msra.mxu0 0
        %540 = vmatprep.subr.bf16.mxu0 0
        %541 = vmatpush2.bf16.msra.mxu0 0
        %542 = vmatprep.mubr.bf16.mxu0 0
        %543 = vmatmul.mubr.bf16.gmra.mxu0 %v448
        %v544 = vpop.f32.mrf.mxu0
        %v545 = vadd.f32 %v505, %v544
        %v546 = vpop.f32.mrf.mxu0
        %v547 = vpop.f32.mrf.mxu0
        %v548 = vadd.f32 %v506, %v547
        %v549 = vpop.f32.mrf.mxu0
        %550 = vdwg.mxu0
        %v551 = vld [vmem:[%s2] sm:$0x1]
        %v553 = vlaneseq
        %v554 = vshrl.u32 %v553, 7
        %v555 = vsub.s32 0, %v554
        %v556 = vrot.slane %v551, %v555
        %v558 = vadd.f32 %v545, %v556
        %v559 = vadd.f32 %v548, %v556
        %v560 = vmax.f32 %v558, 0.0
        %v561 = vmax.f32 %v559, 0.0
        %v562 = vpack.c.bf16 %v561, %v560
        %s563 = scalar_lea.vmem %s3, 4
        %v564 = vld [vmem:[%s563] sm:$0xf]
        %v565 = vld [vmem:[%s3] sm:$0xf]
        %vm566 = vcmask 64512
        %v568 = vsel %vm566, %v562, 0
        %vm570 = vcmask 1043456
        %v572 = vsel %vm570, %v565, 0
        %574 = vmatprep.subr.bf16.mxu0 0
        %575 = vmatpush1.bf16.msra.mxu0 0
        %576 = vmatprep.subr.bf16.mxu0 0
        %577 = vmatpush1.bf16.msra.mxu0 0
        %578 = vmatprep.subr.bf16.mxu0 0
        %579 = vmatpush1.bf16.msra.mxu0 0
        %580 = vmatprep.subr.bf16.mxu0 0
        %581 = vmatpush1.bf16.msra.mxu0 0
        %582 = vmatprep.subr.bf16.mxu0 0
        %583 = vmatpush1.bf16.msra.mxu0 0
        %584 = vmatprep.subr.bf16.mxu0 0
        %585 = vmatpush1.bf16.msra.mxu0 0
        %586 = vmatprep.subr.bf16.mxu0 0
        %587 = vmatpush1.bf16.msra.mxu0 0
        %588 = vmatprep.subr.bf16.mxu0 0
        %589 = vmatpush1.bf16.msra.mxu0 %v572
        %590 = vmatprep.subr.bf16.mxu0 0
        %591 = vmatpush2.bf16.msra.mxu0 0
        %592 = vmatprep.subr.bf16.mxu0 0
        %593 = vmatpush2.bf16.msra.mxu0 0
        %594 = vmatprep.subr.bf16.mxu0 0
        %595 = vmatpush2.bf16.msra.mxu0 0
        %596 = vmatprep.subr.bf16.mxu0 0
        %597 = vmatpush2.bf16.msra.mxu0 0
        %598 = vmatprep.subr.bf16.mxu0 0
        %599 = vmatpush2.bf16.msra.mxu0 0
        %600 = vmatprep.subr.bf16.mxu0 0
        %601 = vmatpush2.bf16.msra.mxu0 0
        %602 = vmatprep.subr.bf16.mxu0 0
        %603 = vmatpush2.bf16.msra.mxu0 0
        %604 = vmatprep.subr.bf16.mxu0 0
        %605 = vmatpush2.bf16.msra.mxu0 0
        %606 = vmatprep.mubr.bf16.mxu0 0
        %607 = vmatmul.mubr.bf16.gmra.mxu0 %v568
        %v608 = vpop.f32.mrf.mxu0
        %v609 = vadd.f32 0.0, %v608
        %v610 = vpop.f32.mrf.mxu0
        %v611 = vpop.f32.mrf.mxu0
        %v612 = vadd.f32 0.0, %v611
        %v613 = vpop.f32.mrf.mxu0
        %614 = vdwg.mxu0
        %v615 = vrot.slane %v609, 7
        %v616 = vrot.slane %v612, 7
        %v617 = vsel %vm499, %v615, %v616
        %v618 = vsel %vm499, %v616, %v615
        %v619 = vsel %vm503, %v618, 0.0
        %v620 = vsel %vm504, %v617, 0.0
        %v622 = vsel %vm570, %v564, 0
        %624 = vmatprep.subr.bf16.mxu0 0
        %625 = vmatpush1.bf16.msra.mxu0 0
        %626 = vmatprep.subr.bf16.mxu0 0
        %627 = vmatpush1.bf16.msra.mxu0 0
        %628 = vmatprep.subr.bf16.mxu0 0
        %629 = vmatpush1.bf16.msra.mxu0 0
        %630 = vmatprep.subr.bf16.mxu0 0
        %631 = vmatpush1.bf16.msra.mxu0 0
        %632 = vmatprep.subr.bf16.mxu0 0
        %633 = vmatpush1.bf16.msra.mxu0 0
        %634 = vmatprep.subr.bf16.mxu0 0
        %635 = vmatpush1.bf16.msra.mxu0 0
        %636 = vmatprep.subr.bf16.mxu0 0
        %637 = vmatpush1.bf16.msra.mxu0 0
        %638 = vmatprep.subr.bf16.mxu0 0
        %639 = vmatpush1.bf16.msra.mxu0 %v622
        %640 = vmatprep.subr.bf16.mxu0 0
        %641 = vmatpush2.bf16.msra.mxu0 0
        %642 = vmatprep.subr.bf16.mxu0 0
        %643 = vmatpush2.bf16.msra.mxu0 0
        %644 = vmatprep.subr.bf16.mxu0 0
        %645 = vmatpush2.bf16.msra.mxu0 0
        %646 = vmatprep.subr.bf16.mxu0 0
        %647 = vmatpush2.bf16.msra.mxu0 0
        %648 = vmatprep.subr.bf16.mxu0 0
        %649 = vmatpush2.bf16.msra.mxu0 0
        %650 = vmatprep.subr.bf16.mxu0 0
        %651 = vmatpush2.bf16.msra.mxu0 0
        %652 = vmatprep.subr.bf16.mxu0 0
        %653 = vmatpush2.bf16.msra.mxu0 0
        %654 = vmatprep.subr.bf16.mxu0 0
        %655 = vmatpush2.bf16.msra.mxu0 0
        %656 = vmatprep.mubr.bf16.mxu0 0
        %657 = vmatmul.mubr.bf16.gmra.mxu0 %v568
        %v658 = vpop.f32.mrf.mxu0
        %v659 = vadd.f32 %v619, %v658
        %v660 = vpop.f32.mrf.mxu0
        %v661 = vpop.f32.mrf.mxu0
        %v662 = vadd.f32 %v620, %v661
        %v663 = vpop.f32.mrf.mxu0
        %664 = vdwg.mxu0
        %v665 = vld [vmem:[%s4] sm:$0x1]
        %v667 = vlaneseq
        %v668 = vshrl.u32 %v667, 7
        %v669 = vsub.s32 0, %v668
        %v670 = vrot.slane %v665, %v669
        %v672 = vadd.f32 %v659, %v670
        %v673 = vadd.f32 %v662, %v670
        %v674 = vmax.f32 %v672, 0.0
        %v675 = vmax.f32 %v673, 0.0
        %v676 = vld [vmem:[%s5] sm:$0x3]
        %v677 = vld [vmem:[%s6] sm:$0x1]
        %v679 = vlaneseq
        %v680 = vshrl.u32 %v679, 7
        %v681 = vsub.s32 0, %v680
        %v682 = vrot.slane %v677, %v681
        %v685 = vsel %vm450, %v676, 0
        %687 = vmatprep.subr.bf16.mxu0 0
        %688 = vmatpush1.bf16.msra.mxu0 0
        %689 = vmatprep.subr.bf16.mxu0 0
        %690 = vmatpush1.bf16.msra.mxu0 0
        %691 = vmatprep.subr.bf16.mxu0 0
        %692 = vmatpush1.bf16.msra.mxu0 0
        %693 = vmatprep.subr.bf16.mxu0 0
        %694 = vmatpush1.bf16.msra.mxu0 0
        %695 = vmatprep.subr.bf16.mxu0 0
        %696 = vmatpush1.bf16.msra.mxu0 0
        %697 = vmatprep.subr.bf16.mxu0 0
        %698 = vmatpush1.bf16.msra.mxu0 0
        %699 = vmatprep.subr.bf16.mxu0 0
        %700 = vmatpush1.bf16.msra.mxu0 0
        %701 = vmatprep.subr.bf16.mxu0 0
        %702 = vmatpush1.bf16.msra.mxu0 %v685
        %703 = vmatprep.subr.bf16.mxu0 0
        %704 = vmatpush2.bf16.msra.mxu0 0
        %705 = vmatprep.subr.bf16.mxu0 0
        %706 = vmatpush2.bf16.msra.mxu0 0
        %707 = vmatprep.subr.bf16.mxu0 0
        %708 = vmatpush2.bf16.msra.mxu0 0
        %709 = vmatprep.subr.bf16.mxu0 0
        %710 = vmatpush2.bf16.msra.mxu0 0
        %711 = vmatprep.subr.bf16.mxu0 0
        %712 = vmatpush2.bf16.msra.mxu0 0
        %713 = vmatprep.subr.bf16.mxu0 0
        %714 = vmatpush2.bf16.msra.mxu0 0
        %715 = vmatprep.subr.bf16.mxu0 0
        %716 = vmatpush2.bf16.msra.mxu0 0
        %717 = vmatprep.subr.bf16.mxu0 0
        %718 = vmatpush2.bf16.msra.mxu0 0
        %719 = vmatprep.mubr.bf16.mxu0 0
        %720 = vmatmul.mubr.bf16.gmra.mxu0 %v448
        %v721 = vpop.f32.mrf.mxu0
        %v722 = vadd.f32 %v682, %v721
        %v723 = vpop.f32.mrf.mxu0
        %v724 = vpop.f32.mrf.mxu0
        %v725 = vadd.f32 %v682, %v724
        %v726 = vpop.f32.mrf.mxu0
        %727 = vdwg.mxu0
        %v728 = vadd.f32 %v674, %v722
        %v729 = vadd.f32 %v675, %v725
        %v730 = vmax.f32 %v728, 0.0
        %v731 = vmax.f32 %v729, 0.0
        %v732 = vpack.c.bf16 %v731, %v730
        %s733 = scalar_lea.vmem %s7, 4
        %v734 = vld [vmem:[%s733] sm:$0xf]
        %v735 = vld [vmem:[%s7] sm:$0xf]
        %v737 = vsel %vm566, %v732, 0
        %v740 = vsel %vm570, %v735, 0
        %742 = vmatprep.subr.bf16.mxu0 0
        %743 = vmatpush1.bf16.msra.mxu0 0
        %744 = vmatprep.subr.bf16.mxu0 0
        %745 = vmatpush1.bf16.msra.mxu0 0
        %746 = vmatprep.subr.bf16.mxu0 0
        %747 = vmatpush1.bf16.msra.mxu0 0
        %748 = vmatprep.subr.bf16.mxu0 0
        %749 = vmatpush1.bf16.msra.mxu0 0
        %750 = vmatprep.subr.bf16.mxu0 0
        %751 = vmatpush1.bf16.msra.mxu0 0
        %752 = vmatprep.subr.bf16.mxu0 0
        %753 = vmatpush1.bf16.msra.mxu0 0
        %754 = vmatprep.subr.bf16.mxu0 0
        %755 = vmatpush1.bf16.msra.mxu0 0
        %756 = vmatprep.subr.bf16.mxu0 0
        %757 = vmatpush1.bf16.msra.mxu0 %v740
        %758 = vmatprep.subr.bf16.mxu0 0
        %759 = vmatpush2.bf16.msra.mxu0 0
        %760 = vmatprep.subr.bf16.mxu0 0
        %761 = vmatpush2.bf16.msra.mxu0 0
        %762 = vmatprep.subr.bf16.mxu0 0
        %763 = vmatpush2.bf16.msra.mxu0 0
        %764 = vmatprep.subr.bf16.mxu0 0
        %765 = vmatpush2.bf16.msra.mxu0 0
        %766 = vmatprep.subr.bf16.mxu0 0
        %767 = vmatpush2.bf16.msra.mxu0 0
        %768 = vmatprep.subr.bf16.mxu0 0
        %769 = vmatpush2.bf16.msra.mxu0 0
        %770 = vmatprep.subr.bf16.mxu0 0
        %771 = vmatpush2.bf16.msra.mxu0 0
        %772 = vmatprep.subr.bf16.mxu0 0
        %773 = vmatpush2.bf16.msra.mxu0 0
        %774 = vmatprep.mubr.bf16.mxu0 0
        %775 = vmatmul.mubr.bf16.gmra.mxu0 %v737
        %v776 = vpop.f32.mrf.mxu0
        %v777 = vadd.f32 0.0, %v776
        %v778 = vpop.f32.mrf.mxu0
        %v779 = vpop.f32.mrf.mxu0
        %v780 = vadd.f32 0.0, %v779
        %v781 = vpop.f32.mrf.mxu0
        %782 = vdwg.mxu0
        %v783 = vrot.slane %v777, 6
        %v784 = vrot.slane %v780, 6
        %vm785 = vcmp.lt.s32.totalorder %v498, 2
        %v786 = vsel %vm785, %v783, %v784
        %v787 = vsel %vm785, %v784, %v783
        %vm788 = vcmp.ge.s32.totalorder %v498, 2
        %vm789 = vcmp.ge.s32.totalorder %v502, 2
        %v790 = vsel %vm788, %v787, 0.0
        %v791 = vsel %vm789, %v786, 0.0
        %v793 = vsel %vm570, %v734, 0
        %795 = vmatprep.subr.bf16.mxu0 0
        %796 = vmatpush1.bf16.msra.mxu0 0
        %797 = vmatprep.subr.bf16.mxu0 0
        %798 = vmatpush1.bf16.msra.mxu0 0
        %799 = vmatprep.subr.bf16.mxu0 0
        %800 = vmatpush1.bf16.msra.mxu0 0
        %801 = vmatprep.subr.bf16.mxu0 0
        %802 = vmatpush1.bf16.msra.mxu0 0
        %803 = vmatprep.subr.bf16.mxu0 0
        %804 = vmatpush1.bf16.msra.mxu0 0
        %805 = vmatprep.subr.bf16.mxu0 0
        %806 = vmatpush1.bf16.msra.mxu0 0
        %807 = vmatprep.subr.bf16.mxu0 0
        %808 = vmatpush1.bf16.msra.mxu0 0
        %809 = vmatprep.subr.bf16.mxu0 0
        %810 = vmatpush1.bf16.msra.mxu0 %v793
        %811 = vmatprep.subr.bf16.mxu0 0
        %812 = vmatpush2.bf16.msra.mxu0 0
        %813 = vmatprep.subr.bf16.mxu0 0
        %814 = vmatpush2.bf16.msra.mxu0 0
        %815 = vmatprep.subr.bf16.mxu0 0
        %816 = vmatpush2.bf16.msra.mxu0 0
        %817 = vmatprep.subr.bf16.mxu0 0
        %818 = vmatpush2.bf16.msra.mxu0 0
        %819 = vmatprep.subr.bf16.mxu0 0
        %820 = vmatpush2.bf16.msra.mxu0 0
        %821 = vmatprep.subr.bf16.mxu0 0
        %822 = vmatpush2.bf16.msra.mxu0 0
        %823 = vmatprep.subr.bf16.mxu0 0
        %824 = vmatpush2.bf16.msra.mxu0 0
        %825 = vmatprep.subr.bf16.mxu0 0
        %826 = vmatpush2.bf16.msra.mxu0 0
        %827 = vmatprep.mubr.bf16.mxu0 0
        %828 = vmatmul.mubr.bf16.gmra.mxu0 %v737
        %v829 = vpop.f32.mrf.mxu0
        %v830 = vadd.f32 %v790, %v829
        %v831 = vpop.f32.mrf.mxu0
        %v832 = vpop.f32.mrf.mxu0
        %v833 = vadd.f32 %v791, %v832
        %v834 = vpop.f32.mrf.mxu0
        %835 = vdwg.mxu0
        %v836 = vld [vmem:[%s8] sm:$0x1]
        %v838 = vlaneseq
        %v839 = vshrl.u32 %v838, 7
        %v840 = vsub.s32 0, %v839
        %v841 = vrot.slane %v836, %v840
        %v843 = vadd.f32 %v830, %v841
        %v844 = vadd.f32 %v833, %v841
        %v845 = vmax.f32 %v843, 0.0
        %v846 = vmax.f32 %v844, 0.0
        %v847 = vpack.c.bf16 %v846, %v845
        %s848 = scalar_lea.vmem %s9, 8
        %v849 = vld [vmem:[%s848] sm:$0xf]
        %v850 = vld [vmem:[%s848 + $0x4] sm:$0xf]
        %v851 = vld [vmem:[%s9] sm:$0xf]
        %v852 = vld [vmem:[%s9 + $0x4] sm:$0xf]
        %v855 = vunpack.c.l.b16 %v851
        %v856 = vunpack.c.l.b16 %v852
        %v857 = vpack.c.b16 %v856, %v855
        %vm859 = vcmask 130048
        %v861 = vsel %vm859, %v847, 0
        %863 = vmatprep.subr.bf16.mxu0 0
        %864 = vmatpush1.bf16.msra.mxu0 0
        %865 = vmatprep.subr.bf16.mxu0 0
        %866 = vmatpush1.bf16.msra.mxu0 0
        %867 = vmatprep.subr.bf16.mxu0 0
        %868 = vmatpush1.bf16.msra.mxu0 0
        %869 = vmatprep.subr.bf16.mxu0 0
        %870 = vmatpush1.bf16.msra.mxu0 0
        %871 = vmatprep.subr.bf16.mxu0 0
        %872 = vmatpush1.bf16.msra.mxu0 0
        %873 = vmatprep.subr.bf16.mxu0 0
        %874 = vmatpush1.bf16.msra.mxu0 0
        %875 = vmatprep.subr.bf16.mxu0 0
        %876 = vmatpush1.bf16.msra.mxu0 0
        %877 = vmatprep.subr.bf16.mxu0 0
        %878 = vmatpush1.bf16.msra.mxu0 %v857
        %879 = vmatprep.subr.bf16.mxu0 0
        %880 = vmatpush2.bf16.msra.mxu0 0
        %881 = vmatprep.subr.bf16.mxu0 0
        %882 = vmatpush2.bf16.msra.mxu0 0
        %883 = vmatprep.subr.bf16.mxu0 0
        %884 = vmatpush2.bf16.msra.mxu0 0
        %885 = vmatprep.subr.bf16.mxu0 0
        %886 = vmatpush2.bf16.msra.mxu0 0
        %887 = vmatprep.subr.bf16.mxu0 0
        %888 = vmatpush2.bf16.msra.mxu0 0
        %889 = vmatprep.subr.bf16.mxu0 0
        %890 = vmatpush2.bf16.msra.mxu0 0
        %891 = vmatprep.subr.bf16.mxu0 0
        %892 = vmatpush2.bf16.msra.mxu0 0
        %893 = vmatprep.subr.bf16.mxu0 0
        %894 = vmatpush2.bf16.msra.mxu0 0
        %895 = vmatprep.mubr.bf16.mxu0 0
        %896 = vmatmul.mubr.bf16.gmra.mxu0 %v861
        %v897 = vpop.f32.mrf.mxu0
        %v898 = vadd.f32 0.0, %v897
        %v899 = vpop.f32.mrf.mxu0
        %v900 = vpop.f32.mrf.mxu0
        %v901 = vadd.f32 0.0, %v900
        %v902 = vpop.f32.mrf.mxu0
        %903 = vdwg.mxu0
        %v904 = vrot.slane %v898, 6
        %v905 = vrot.slane %v901, 6
        %v906 = vsel %vm785, %v904, %v905
        %v907 = vsel %vm785, %v905, %v904
        %v908 = vsel %vm788, %v907, 0.0
        %v909 = vsel %vm789, %v906, 0.0
        %v912 = vunpack.c.l.b16 %v849
        %v913 = vunpack.c.l.b16 %v850
        %v914 = vpack.c.b16 %v913, %v912
        %916 = vmatprep.subr.bf16.mxu0 0
        %917 = vmatpush1.bf16.msra.mxu0 0
        %918 = vmatprep.subr.bf16.mxu0 0
        %919 = vmatpush1.bf16.msra.mxu0 0
        %920 = vmatprep.subr.bf16.mxu0 0
        %921 = vmatpush1.bf16.msra.mxu0 0
        %922 = vmatprep.subr.bf16.mxu0 0
        %923 = vmatpush1.bf16.msra.mxu0 0
        %924 = vmatprep.subr.bf16.mxu0 0
        %925 = vmatpush1.bf16.msra.mxu0 0
        %926 = vmatprep.subr.bf16.mxu0 0
        %927 = vmatpush1.bf16.msra.mxu0 0
        %928 = vmatprep.subr.bf16.mxu0 0
        %929 = vmatpush1.bf16.msra.mxu0 0
        %930 = vmatprep.subr.bf16.mxu0 0
        %931 = vmatpush1.bf16.msra.mxu0 %v914
        %932 = vmatprep.subr.bf16.mxu0 0
        %933 = vmatpush2.bf16.msra.mxu0 0
        %934 = vmatprep.subr.bf16.mxu0 0
        %935 = vmatpush2.bf16.msra.mxu0 0
        %936 = vmatprep.subr.bf16.mxu0 0
        %937 = vmatpush2.bf16.msra.mxu0 0
        %938 = vmatprep.subr.bf16.mxu0 0
        %939 = vmatpush2.bf16.msra.mxu0 0
        %940 = vmatprep.subr.bf16.mxu0 0
        %941 = vmatpush2.bf16.msra.mxu0 0
        %942 = vmatprep.subr.bf16.mxu0 0
        %943 = vmatpush2.bf16.msra.mxu0 0
        %944 = vmatprep.subr.bf16.mxu0 0
        %945 = vmatpush2.bf16.msra.mxu0 0
        %946 = vmatprep.subr.bf16.mxu0 0
        %947 = vmatpush2.bf16.msra.mxu0 0
        %948 = vmatprep.mubr.bf16.mxu0 0
        %949 = vmatmul.mubr.bf16.gmra.mxu0 %v861
        %v950 = vpop.f32.mrf.mxu0
        %v951 = vadd.f32 %v908, %v950
        %v952 = vpop.f32.mrf.mxu0
        %v953 = vpop.f32.mrf.mxu0
        %v954 = vadd.f32 %v909, %v953
        %v955 = vpop.f32.mrf.mxu0
        %956 = vdwg.mxu0
        %v957 = vld [vmem:[%s10] sm:$0x1]
        %v959 = vlaneseq
        %v960 = vshrl.u32 %v959, 7
        %v961 = vsub.s32 0, %v960
        %v962 = vrot.slane %v957, %v961
        %v964 = vadd.f32 %v951, %v962
        %v965 = vadd.f32 %v954, %v962
        %v966 = vmax.f32 %v964, 0.0
        %v967 = vmax.f32 %v965, 0.0
        %v968 = vld [vmem:[%s11] sm:$0xf]
        %v969 = vld [vmem:[%s12] sm:$0x1]
        %v971 = vlaneseq
        %v972 = vshrl.u32 %v971, 7
        %v973 = vsub.s32 0, %v972
        %v974 = vrot.slane %v969, %v973
        %v977 = vsel %vm570, %v968, 0
        %979 = vmatprep.subr.bf16.mxu0 0
        %980 = vmatpush1.bf16.msra.mxu0 0
        %981 = vmatprep.subr.bf16.mxu0 0
        %982 = vmatpush1.bf16.msra.mxu0 0
        %983 = vmatprep.subr.bf16.mxu0 0
        %984 = vmatpush1.bf16.msra.mxu0 0
        %985 = vmatprep.subr.bf16.mxu0 0
        %986 = vmatpush1.bf16.msra.mxu0 0
        %987 = vmatprep.subr.bf16.mxu0 0
        %988 = vmatpush1.bf16.msra.mxu0 0
        %989 = vmatprep.subr.bf16.mxu0 0
        %990 = vmatpush1.bf16.msra.mxu0 0
        %991 = vmatprep.subr.bf16.mxu0 0
        %992 = vmatpush1.bf16.msra.mxu0 0
        %993 = vmatprep.subr.bf16.mxu0 0
        %994 = vmatpush1.bf16.msra.mxu0 %v977
        %995 = vmatprep.subr.bf16.mxu0 0
        %996 = vmatpush2.bf16.msra.mxu0 0
        %997 = vmatprep.subr.bf16.mxu0 0
        %998 = vmatpush2.bf16.msra.mxu0 0
        %999 = vmatprep.subr.bf16.mxu0 0
        %1000 = vmatpush2.bf16.msra.mxu0 0
        %1001 = vmatprep.subr.bf16.mxu0 0
        %1002 = vmatpush2.bf16.msra.mxu0 0
        %1003 = vmatprep.subr.bf16.mxu0 0
        %1004 = vmatpush2.bf16.msra.mxu0 0
        %1005 = vmatprep.subr.bf16.mxu0 0
        %1006 = vmatpush2.bf16.msra.mxu0 0
        %1007 = vmatprep.subr.bf16.mxu0 0
        %1008 = vmatpush2.bf16.msra.mxu0 0
        %1009 = vmatprep.subr.bf16.mxu0 0
        %1010 = vmatpush2.bf16.msra.mxu0 0
        %1011 = vmatprep.mubr.bf16.mxu0 0
        %1012 = vmatmul.mubr.bf16.gmra.mxu0 %v737
        %v1013 = vpop.f32.mrf.mxu0
        %v1014 = vadd.f32 %v974, %v1013
        %v1015 = vpop.f32.mrf.mxu0
        %v1016 = vpop.f32.mrf.mxu0
        %v1017 = vadd.f32 %v974, %v1016
        %v1018 = vpop.f32.mrf.mxu0
        %1019 = vdwg.mxu0
        %v1020 = vadd.f32 %v966, %v1014
        %v1021 = vadd.f32 %v967, %v1017
        %v1022 = vmax.f32 %v1020, 0.0
        %v1023 = vmax.f32 %v1021, 0.0
        %1024 = vst.msk [vmem:[%s433] sm:$0xff] %vm859, %v1022
        %1025 = vst.msk [vmem:[%s433 + $0x8] sm:$0xff] %vm859, %v1023
        %s1026 = sand.u32 %s313, 1
        %s1027 = scalar_lea.sflag [#allocation3], %s1026
        %s1028 = sand.u32 %s313, 1
        %s1029 = smul.addr %s1028, 16
        %s1030 = scalar_lea.vmem [#allocation2], %s1029
        // Predicated region
        $region73: #{tpu_custom_call.1} parent=71 // pred_check
          %p1031 = pneg %p323
        $region74: #{tpu_custom_call.1} parent=71 // pred_check_branch
          %1033 = sbr.rel (%p1031) target = $region76
        $region75: #{tpu_custom_call.1} parent=71 // pred_region
          %s1035 = ssub.s32 256, 256
          %1036 = vsyncadd %s1027, %s1035
          %s1037 = smul.addr %s27, 2
          %s1038 = smul.addr %s1037, 128
          %s1039 = scalar_lea.hbm %s13, %s1038
          %s1040 = sshll.u32 %s1030, 4
          %s1041 = int_to_ptr.vmem [resolvable:$true] %s1040
          %1046 = dma.vmem_to_hbm [thread:$0]  %s1041, 256, %s1039, %s1027, 128, 128, 8
        $region76: #{tpu_custom_call.1} parent=71 // pred_fallthru
          _
      $region72: #{tpu_custom_call.1} parent=5 // pred_fallthru
        _
      %p1047 = scmp.le.s32.totalorder 2, %s22
      // Predicated region
      $region77: #{tpu_custom_call.1} parent=5 // pred_check
        %p1048 = pneg %p1047
      $region78: #{tpu_custom_call.1} parent=5 // pred_check_branch
        %1050 = sbr.rel (%p1048) target = $region80
      $region79: #{tpu_custom_call.1} parent=5 // pred_region
        %s1051 = ssub.s32 %s22, 2
        // Predicated region
        $region81: #{tpu_custom_call.1} parent=79 // pred_check
          %p1052 = pneg %p329
        $region82: #{tpu_custom_call.1} parent=79 // pred_check_branch
          %1054 = sbr.rel (%p1052) target = $region84
        $region83: #{tpu_custom_call.1} parent=79 // pred_region
          %s1055 = sand.u32 %s314, 1
          %s1056 = scalar_lea.sflag [#allocation3], %s1055
          %s1057 = sand.u32 %s314, 1
          %s1058 = smul.addr %s1057, 16
          %s1059 = scalar_lea.vmem [#allocation2], %s1058
          %1060 = dma.done %s1056, 256
        $region84: #{tpu_custom_call.1} parent=79 // pred_fallthru
          _
      $region80: #{tpu_custom_call.1} parent=5 // pred_fallthru
        _
    $region6: #{tpu_custom_call.1} parent=1 // loop_footer
      %s26 = sadd.s32 1, %s22
    $region7: #{tpu_custom_call.1} parent=1 // loop_footer_branch
      %21 = sbr.rel target = $region3
    $region8: #{tpu_custom_call.1} parent=1 // loop_exit
      _
    %1061 = vsyncpa [#allocation3], 1
    %s1062 = scalar_lea.sflag [#allocation3], 1
    %1063 = vsyncpa %s1062, 1

</llo_original>
